<compile_context>
chip_gen: v7x
topology: tpu7x:2x2x1
jax: 0.10.0
libtpu: 0.0.40
codegen_flags: <defaults>
</compile_context>

<pallas_src>
import jax
import jax.numpy as jnp
import numpy as np
from jax.experimental import pallas as pl
from jax.experimental.pallas import tpu as pltpu


# ---------------------------------------------------------------------------
# Zero-copy path: output aliases input; body only pins the read/write dep.
# ---------------------------------------------------------------------------
def _alias_kernel(x_ref, o_ref):
    # x_ref and o_ref refer to the same HBM buffer (input_output_aliases).
    # The contiguous un-flatten needs no data movement; just make the aliased
    # output count as produced by this kernel.
    del x_ref
    pltpu.touch(o_ref)


def _unflatten_alias(x):
    B, flat = x.shape
    return pl.pallas_call(
        _alias_kernel,
        out_shape=jax.ShapeDtypeStruct((B, flat), x.dtype),
        in_specs=[pl.BlockSpec(memory_space=pl.ANY)],
        out_specs=pl.BlockSpec(memory_space=pl.ANY),
        input_output_aliases={0: 0},
    )(x)


# ---------------------------------------------------------------------------
# Fallback / opt-in path: lane-dense tiled copy with VMEM-aware block sizes.
# ---------------------------------------------------------------------------
def _copy_kernel(x_ref, o_ref):
    o_ref[...] = x_ref[...]


def _choose_copy_tiles(batch, flat, itemsize, budget=2 * 1024 * 1024):
    """Pick (row_tile, col_tile) for the copy kernel.

    * col_tile is the full row when a minimal (sub, flat) block fits the
      ~2 MiB budget; otherwise a multiple of 128 lanes (lane-dense, bounded
      VMEM on every generation, incl. v7x's 64 MiB part).
    * row_tile is a multiple of the packed sublane count (8 f32 / 16 bf16 /
      32 int8) so stores stay unmasked, and is capped near ceil(B/2) so a
      one-step grid does not leave one v7x TensorCore idle.
    """
    sub = 8 * max(1, 4 // max(1, itemsize))          # packed sublanes per vreg
    if flat * itemsize * sub <= budget:
        col = flat                                   # full, lane-dense row
        rows = budget // max(1, flat * itemsize)
    else:
        col = max(128, (budget // (sub * itemsize)) // 128 * 128)
        rows = sub
    if rows >= batch:
        row = batch                                  # full dim is always legal
        if batch >= 2 * sub:                         # split for v7x megacore
            half = (batch + 1) // 2
            row = ((half + sub - 1) // sub) * sub
    else:
        row = max(sub, (rows // sub) * sub)
    row = min(row, batch)
    return row, col


def _unflatten_copy(x):
    B, flat = x.shape
    tb, tf = _choose_copy_tiles(B, flat, x.dtype.itemsize)
    grid = (pl.cdiv(B, tb), pl.cdiv(flat, tf))
    return pl.pallas_call(
        _copy_kernel,
        out_shape=jax.ShapeDtypeStruct((B, flat), x.dtype),
        grid=grid,
        in_specs=[pl.BlockSpec((tb, tf), lambda i, j: (i, j))],
        out_specs=pl.BlockSpec((tb, tf), lambda i, j: (i, j)),
        compiler_params=pltpu.CompilerParams(
            dimension_semantics=("parallel", "parallel"),
        ),
        cost_estimate=pl.CostEstimate(
            flops=0,
            transcendentals=0,
            bytes_accessed=2 * x.size * x.dtype.itemsize,
        ),
    )(x)


# ---------------------------------------------------------------------------
# Public wrapper — matches UnFlatten.forward.
# ---------------------------------------------------------------------------
def unflatten(x, n_channels, height, width, *, zero_copy=True):
    """Pallas equivalent of UnFlatten.forward: (B, C*H*W) -> (B, C, H, W)."""
    B, flat = x.shape
    assert flat == n_channels * height * width, (
        f"cannot unflatten {flat} into ({n_channels},{height},{width})")

    if zero_copy:
        try:
            flat_out = _unflatten_alias(x)
        except Exception:
            # Defensive only: if the aliased no-op body fails to lower on some
            # backend, fall back to the (still correct) tiled copy.
            flat_out = _unflatten_copy(x)
    else:
        flat_out = _unflatten_copy(x)

    # Contiguous row-major view; metadata-only in XLA — bit-identical to
    # torch .view for a contiguous input.
    return flat_out.reshape(B, n_channels, height, width)


if __name__ == "__main__":
    # Small shapes consistent with the module: batch=2, channels=4, 16x16 spatial.
    B, C, H, W = 2, 4, 16, 16
    key = jax.random.PRNGKey(0)
    x = jax.random.normal(key, (B, C * H * W), dtype=jnp.float32)

    x_host = np.asarray(x)
    expected = x_host.reshape(B, C, H, W)

    # Default zero-copy (aliased) path.
    y = jax.block_until_ready(unflatten(jnp.asarray(x_host), C, H, W))
    assert y.shape == (B, C, H, W)
    assert y.dtype == x.dtype
    assert np.array_equal(np.asarray(y), expected)

    # Explicit tiled-copy path (materialized copy), also checked.
    y2 = jax.block_until_ready(
        unflatten(jnp.asarray(x_host), C, H, W, zero_copy=False))
    assert np.array_equal(np.asarray(y2), expected)

    print("KERNEL_OK")
</pallas_src>

<mosaic_0001>
module attributes {stable_mosaic.version = 11 : i64} {
  func.func @_alias_kernel(%arg0: memref<2x1024xf32, #tpu.memory_space<any>>, %arg1: memref<2x1024xf32, #tpu.memory_space<any>>) attributes {dimension_semantics = [], scalar_prefetch = 0 : i64, scratch_operands = 0 : i64, tpu.core_type = #tpu.core_type<tc>} {
    return
  }
}

module attributes {stable_mosaic.version = 11 : i64} {
  func.func @_copy_kernel(%arg0: i32, %arg1: i32, %arg2: memref<2x1024xf32, #tpu.memory_space<vmem>>, %arg3: memref<2x1024xf32, #tpu.memory_space<vmem>>) attributes {dimension_semantics = [#tpu.dimension_semantics<parallel>, #tpu.dimension_semantics<parallel>], iteration_bounds = array<i64: 1, 1>, scalar_prefetch = 0 : i64, scratch_operands = 0 : i64, tpu.core_type = #tpu.core_type<tc>, window_params = [{transform_indices = @transform_0, window_bounds = array<i64: 2, 1024>}, {transform_indices = @transform_1, window_bounds = array<i64: 2, 1024>}]} {
    %c0 = arith.constant 0 : index
    %c0_0 = arith.constant 0 : index
    %0 = vector.load %arg2[%c0, %c0_0] : memref<2x1024xf32, #tpu.memory_space<vmem>>, vector<2x1024xf32>
    %c0_1 = arith.constant 0 : index
    %c0_2 = arith.constant 0 : index
    %1 = vector.load %arg3[%c0_1, %c0_2] : memref<2x1024xf32, #tpu.memory_space<vmem>>, vector<2x1024xf32>
    tpu.vector_store %arg3[%c0_1, %c0_2], %0 {strides = array<i32>} : memref<2x1024xf32, #tpu.memory_space<vmem>>, vector<2x1024xf32>,
    return
  }
  func.func @transform_0(%arg0: i32, %arg1: i32) -> (i32, i32) {
    %c0_i32 = arith.constant 0 : i32
    return %arg0, %arg1 : i32, i32
  }
  func.func @transform_1(%arg0: i32, %arg1: i32) -> (i32, i32) {
    %c0_i32 = arith.constant 0 : i32
    return %arg0, %arg1 : i32, i32
  }
}

</mosaic_0001>

<llo_original>
// kernel: tpu_custom_call.1
$region0: #{tpu_custom_call.1}
  #allocation0 [shape = 'u32[]', space=smem, size = 0x4, offset = 0x4, fixed_abs, tag = 'smem constant byte address 0x4 - core index']
  #allocation1 [shape = 'u32[144,128]{1,0:T(1,128)}', space=vmem, size = 0x12000, scoped, tag = 'internal scratch']
  %s0 = inlined_call_operand.hbm [shape: f32[2,1024], index: 0, kind: input, shape index: {}, may-alias: {0,1}]
  %s1 = inlined_call_operand.hbm [shape: f32[2,1024], index: 1, kind: output, shape index: {}, may-alias: {0,1}]
  %s2 = sld [smem:[#allocation0]]
  $region2: #{tpu_custom_call.1} parent=0
    _
  %s4 = ssub.s32 1, %s2
  %s5 = scalar_select 0, %s4, %s2

// kernel: tpu_custom_call.1
$region0: #{tpu_custom_call.1}
  #allocation0 [shape = 'u32[]', space=smem, size = 0x4, offset = 0x4, fixed_abs, tag = 'smem constant byte address 0x4 - core index']
  #allocation1 [shape = 'u32[144,128]{1,0:T(1,128)}', space=vmem, size = 0x12000, scoped, tag = 'internal scratch']
  %s0 = inlined_call_operand.hbm [shape: f32[2,1024], index: 0, kind: input, shape index: {}]
  %s1 = inlined_call_operand.hbm [shape: f32[2,1024], index: 1, kind: output, shape index: {}]
  %s2 = sld [smem:[#allocation0]]
  $region18: #{tpu_custom_call.1} parent=0
    _
  %s4 = ssub.s32 1, %s2
  %s5 = scalar_select 0, %s4, %s2
  $region1: #{tpu_custom_call.1} parent=0
    #allocation2 [shape = 'u8[8192]{0}', space=vmem, size = 0x2000, scoped, tag = 'input window, operand 0, single buffered']
    #allocation3 [shape = 's32[1]{0}', space=sflag, size = 0x4, scoped, tag = 'scoped memory for tpu_custom_call.1']
    #allocation4 [shape = 's32[1]{0}', space=sflag, size = 0x4, scoped, tag = 'scoped memory for tpu_custom_call.1']
    #allocation5 [shape = 'u8[8192]{0}', space=vmem, size = 0x2000, scoped, tag = 'output window, operand 0, single buffered']
    %6 = vsyncpa [#allocation3], 0
    %7 = vsyncpa [#allocation4], 0
    // Predicated region
    $region2: #{tpu_custom_call.1} parent=1 // pred_check
      _
    $region3: #{tpu_custom_call.1} parent=1 // pred_check_branch
      %9 = sbr.rel (0) target = $region5
    $region4: #{tpu_custom_call.1} parent=1 // pred_region
      %s11 = ssub.s32 256, 256
      %12 = vsyncadd [#allocation3], %s11
      %s14 = sshll.u32 [#allocation2], 4
      %s15 = int_to_ptr.vmem [resolvable:$true] %s14
      %17 = dma.hbm_to_vmem [thread:$0]  %s0, 256, %s15, [#allocation3]
    $region5: #{tpu_custom_call.1} parent=1 // pred_fallthru
      _
    // Predicated region
    $region6: #{tpu_custom_call.1} parent=1 // pred_check
      _
    $region7: #{tpu_custom_call.1} parent=1 // pred_check_branch
      %19 = sbr.rel (0) target = $region9
    $region8: #{tpu_custom_call.1} parent=1 // pred_region
      %20 = dma.done [#allocation3], 256
    $region9: #{tpu_custom_call.1} parent=1 // pred_fallthru
      _
    %v21 = vld [vmem:[#allocation2] sm:$0xff]
    %v22 = vld [vmem:[#allocation2 + $0x8] sm:$0xff]
    %23 = vst [vmem:[#allocation5] sm:$0xff] %v21
    %24 = vst [vmem:[#allocation5 + $0x8] sm:$0xff] %v22
    // Predicated region
    $region10: #{tpu_custom_call.1} parent=1 // pred_check
      _
    $region11: #{tpu_custom_call.1} parent=1 // pred_check_branch
      %26 = sbr.rel (0) target = $region13
    $region12: #{tpu_custom_call.1} parent=1 // pred_region
      %s28 = ssub.s32 256, 256
      %29 = vsyncadd [#allocation4], %s28
      %s31 = sshll.u32 [#allocation5], 4
      %s32 = int_to_ptr.vmem [resolvable:$true] %s31
      %34 = dma.vmem_to_hbm [thread:$0]  %s32, 256, %s1, [#allocation4]
    $region13: #{tpu_custom_call.1} parent=1 // pred_fallthru
      _
    // Predicated region
    $region14: #{tpu_custom_call.1} parent=1 // pred_check
      _
    $region15: #{tpu_custom_call.1} parent=1 // pred_check_branch
      %36 = sbr.rel (0) target = $region17
    $region16: #{tpu_custom_call.1} parent=1 // pred_region
      %37 = dma.done [#allocation4], 256
    $region17: #{tpu_custom_call.1} parent=1 // pred_fallthru
      _
    %38 = vsyncpa [#allocation3], 1
    %39 = vsyncpa [#allocation4], 1

</llo_original>
